<compile_context>
chip_gen: v7x
topology: tpu7x:2x2x1
jax: 0.10.0
libtpu: 0.0.40
codegen_flags: <defaults>
</compile_context>

<pallas_src>
import math

import jax
import jax.numpy as jnp
import numpy as np
from jax.experimental import pallas as pl
from jax.experimental.pallas import tpu as pltpu

LANE = 128      # lane width (output padding target for unmasked stores)
SUBLANE = 16    # bf16 sublane packing (row padding / tile granularity)


def _cdiv(a, b):
    return -(-a // b)


def _round_up(x, m):
    return _cdiv(x, m) * m


def _vmem_capacity_bytes():
    try:
        return int(pltpu.get_tpu_info().vmem_capacity_bytes)
    except Exception:
        return 64 << 20          # conservative (v7x per-TC VMEM)


# ---------------------------------------------------------------------------
# Pallas kernel: 4 fused (pre-folded) Linear layers.
# bf16 MXU operands, f32 accumulation / bias / offset add, bf16 store.
# ---------------------------------------------------------------------------
def _fused_mlp_kernel(
    x_ref,                      # (TB, s*d)          bf16   streamed
    w1_ref, b1_ref,             # (s*d, nhid) bf16, (1, nhid) f32          resident
    w23_ref, b23_ref,           # (nhid, nout) bf16, (1, nout) f32         resident (folded)
    w45_ref, b45_ref,           # (nout, dec_nhid) bf16, (1, dec_nhid) f32 resident (folded)
    oe_ref,                     # (TB, dec_nhid)     bf16   streamed (oe_table @ W5, gathered)
    w6_ref, b6_ref,             # (dec_nhid, OUT_PAD) bf16, (1, OUT_PAD) f32  resident
    out_ref,                    # (TB, OUT_PAD)      bf16   streamed
):
    f32 = jnp.float32
    bf16 = jnp.bfloat16

    x = x_ref[...]

    # encoder.mlp Linear1 + ReLU
    h = jnp.dot(x, w1_ref[...], preferred_element_type=f32) + b1_ref[...]
    h = jnp.maximum(h, 0.0).astype(bf16)

    # folded (encoder.mlp Linear2 -> summarizer Linear1) + ReLU
    h2 = jnp.dot(h, w23_ref[...], preferred_element_type=f32) + b23_ref[...]
    h2 = jnp.maximum(h2, 0.0).astype(bf16)

    # folded (summarizer Linear2 -> offset add -> decoder Linear1) + ReLU
    h3 = (jnp.dot(h2, w45_ref[...], preferred_element_type=f32)
          + b45_ref[...] + oe_ref[...].astype(f32))
    h3 = jnp.maximum(h3, 0.0).astype(bf16)

    # decoder Linear2 (lane-dense bf16 store)
    out = jnp.dot(h3, w6_ref[...], preferred_element_type=f32) + b6_ref[...]
    out_ref[...] = out.astype(out_ref.dtype)


def fused_forward_pallas(x_flat, oe_rows, fused, out_dim, *, tb_max=256):
    """x_flat: (B, s*d) bf16; oe_rows: (B, dec_nhid) bf16 (already oe@W5-folded & gathered)."""
    w1, b1 = fused["w1"], fused["b1"]
    w23, b23 = fused["w23"], fused["b23"]
    w45, b45 = fused["w45"], fused["b45"]
    w6, b6 = fused["w6"], fused["b6"]

    B, in_dim = x_flat.shape
    dec_dim = w45.shape[1]
    OUT_PAD = w6.shape[1]

    # Row tiling:
    #  - >=2 balanced tiles when there is enough work so ("parallel",) can use both
    #    TensorCores on v7x; one extra grid step (~0.35us) is negligible on v5e/v6e.
    #  - tiles balanced so the last tile is not mostly padding.
    n_tiles = max(_cdiv(B, tb_max), 2 if B >= 2 * SUBLANE else 1)
    TB = _round_up(_cdiv(B, n_tiles), SUBLANE)

    # VMEM budget derived from the actual chip (v7x: 64 MiB) with headroom.
    cap = _vmem_capacity_bytes() - (8 << 20)
    resident = (w1, b1, w23, b23, w45, b45, w6, b6)
    wbytes = sum(int(np.prod(a.shape)) * a.dtype.itemsize for a in resident)
    widest = max(in_dim, w1.shape[1], w23.shape[1], dec_dim, OUT_PAD)

    def stream_bytes(tb):
        return (2 * tb * (in_dim + dec_dim + OUT_PAD) * 2    # double-buffered bf16 streams
                + 6 * tb * widest * 4)                        # f32 intermediates

    while 2 * wbytes + stream_bytes(TB) > cap and TB > SUBLANE:
        TB = max(SUBLANE, _round_up(TB // 2, SUBLANE))
    # TODO(synk): if the (folded) weights alone ever exceed VMEM, tile the widest layer
    # over an extra "arbitrary" K grid axis instead of relying on full weight residency.

    B_pad = _round_up(B, TB)
    grid = B_pad // TB

    # Row-only padding (feature dims stay at natural width => no lane-pad HBM pass).
    x_pad = jnp.pad(x_flat, ((0, B_pad - B), (0, 0)))
    oe_pad = jnp.pad(oe_rows, ((0, B_pad - B), (0, 0)))

    est = 2 * wbytes + stream_bytes(TB)
    vmem_limit = int(min(max(est + (4 << 20), 16 << 20), cap))

    flops = 2 * B_pad * (in_dim * w1.shape[1] + w23.shape[0] * w23.shape[1]
                         + w45.shape[0] * dec_dim + dec_dim * OUT_PAD)
    bytes_accessed = (x_pad.size * 2 + oe_pad.size * 2 + wbytes + B_pad * OUT_PAD * 2)
    cost = pl.CostEstimate(flops=int(flops), transcendentals=0,
                           bytes_accessed=int(bytes_accessed))

    inputs = (x_pad, w1, b1, w23, b23, w45, b45, oe_pad, w6, b6)

    def build(weight_pipeline_mode):
        def row_spec(n):
            return pl.BlockSpec((TB, n), lambda i: (i, 0))

        def res_spec(arr):
            # Constant block index across the grid -> weights stay VMEM-resident;
            # single buffer suffices (halves resident-weight VMEM vs default).
            if weight_pipeline_mode is None:
                return pl.BlockSpec(arr.shape, lambda i: (0, 0))
            return pl.BlockSpec(arr.shape, lambda i: (0, 0),
                                pipeline_mode=weight_pipeline_mode)

        in_specs = ([row_spec(in_dim)]
                    + [res_spec(a) for a in (w1, b1, w23, b23, w45, b45)]
                    + [row_spec(dec_dim)]
                    + [res_spec(a) for a in (w6, b6)])
        return pl.pallas_call(
            _fused_mlp_kernel,
            out_shape=jax.ShapeDtypeStruct((B_pad, OUT_PAD), jnp.bfloat16),
            grid=(grid,),
            in_specs=in_specs,
            out_specs=row_spec(OUT_PAD),
            compiler_params=pltpu.CompilerParams(
                dimension_semantics=("parallel",),
                vmem_limit_bytes=vmem_limit),
            cost_estimate=cost,
        )

    try:
        out = build(pl.Buffered(1))(*inputs)
    except Exception:
        # Fallback if this jax version rejects pipeline_mode on BlockSpec.
        out = build(None)(*inputs)

    return out[:B, :out_dim]


# ---------------------------------------------------------------------------
# Parameter / buffer construction (deterministic, synthetic) and f32 folding
# ---------------------------------------------------------------------------
def make_params(key, seq_len, d, nhid, nout, dec_nhid, future_len):
    def linear(k, nin, nout_):
        kw, kb = jax.random.split(k)
        scale = 1.0 / math.sqrt(nin)
        w = jax.random.uniform(kw, (nin, nout_), jnp.float32, -scale, scale)
        b = jax.random.uniform(kb, (1, nout_), jnp.float32, -scale, scale)
        return w, b

    ks = jax.random.split(key, 6)
    return {
        "mlp1": linear(ks[0], seq_len * d, nhid),
        "mlp2": linear(ks[1], nhid, seq_len * nout),
        "sum1": linear(ks[2], seq_len * nout, nout),
        "sum2": linear(ks[3], nout, nout),
        "dec1": linear(ks[4], nout, dec_nhid),
        "dec2": linear(ks[5], dec_nhid, future_len * d),
    }


def make_offset_encoding_table(nembed, max_len):
    """Sinusoidal table as in FutureOffsetEncoder.__init__ (nembed must be even)."""
    positions = jnp.arange(max_len, dtype=jnp.float32)[:, None]
    div_term = jnp.exp(
        jnp.arange(0, nembed, 2, dtype=jnp.float32) * (-math.log(10000.0) / nembed))
    oe = jnp.zeros((max_len, nembed), jnp.float32)
    oe = oe.at[:, 0::2].set(jnp.sin(positions * div_term))
    oe = oe.at[:, 1::2].set(jnp.cos(positions * div_term))
    return oe


def fold_params(params, oe_table):
    """Fold adjacent Linears with no nonlinearity between them (exact, done in f32)."""
    w1, b1 = params["mlp1"]
    w2, b2 = params["mlp2"]
    w3, b3 = params["sum1"]
    w4, b4 = params["sum2"]
    w5, b5 = params["dec1"]
    w6, b6 = params["dec2"]

    w23 = w2 @ w3                       # (nhid, nout)
    b23 = b2 @ w3 + b3
    w45 = w4 @ w5                       # (nout, dec_nhid)
    b45 = b4 @ w5 + b5
    oew5 = oe_table @ w5                # (max_len, dec_nhid)  offset encoding pre-multiplied

    out_dim = w6.shape[1]
    OUT_PAD = _round_up(out_dim, LANE)  # lane-dense output stores
    w6p = jnp.pad(w6, ((0, 0), (0, OUT_PAD - out_dim)))
    b6p = jnp.pad(b6, ((0, 0), (0, OUT_PAD - out_dim)))

    bf16 = jnp.bfloat16
    # TODO(synk): int8 (v6e) / fp8 (v7x) weight quantization with scales folded into the
    # f32 biases would halve resident-weight bytes again; omitted to stay within the
    # f32-reference accuracy budget.
    return {
        "w1": w1.astype(bf16), "b1": b1,
        "w23": w23.astype(bf16), "b23": b23,
        "w45": w45.astype(bf16), "b45": b45,
        "w6": w6p.astype(bf16), "b6": b6p,
        "oew5": oew5,
        "out_dim": out_dim,
    }


# ---------------------------------------------------------------------------
# Full module forward (thin glue in JAX, hot path in Pallas)
# ---------------------------------------------------------------------------
def _flatten_inputs(observed):
    s, b, p, d = observed.shape
    B = b * p
    # EncoderMLP flattening (s, B, d) -> (B, s*d): cast to bf16 BEFORE the transpose
    # (half the bytes moved) and do not lane-pad (feature dim stays at s*d).
    # TODO(synk): for production, accept the observation buffer already in (B, s*d)
    # layout or fold this transpose into the input BlockSpec index_map.
    x = observed.astype(jnp.bfloat16).reshape(s, B, d)
    return jnp.transpose(x, (1, 0, 2)).reshape(B, s * d)


def pallas_forward(observed, offset, fused, *, future_len):
    s, b, p, d = observed.shape
    x_flat = _flatten_inputs(observed)
    offsets_rep = jnp.repeat(offset, p)                          # repeat_interleave
    oe_rows = fused["oew5"][offsets_rep].astype(jnp.bfloat16)    # (B, dec_nhid)
    # TODO(synk): this tiny gather could move in-kernel (PrefetchScalarGridSpec with the
    # offsets in SMEM + a VMEM-resident oew5 table) to drop the per-row oe stream entirely.
    decoded = fused_forward_pallas(x_flat, oe_rows, fused, fused["out_dim"])
    decoded = decoded.astype(jnp.float32)
    return jnp.transpose(decoded.reshape(b, p, future_len, d), (2, 0, 1, 3))


# ---------------------------------------------------------------------------
# References
# ---------------------------------------------------------------------------
def reference_forward_module(observed, offset, params, oe_table, *, future_len):
    """Faithful f32 re-implementation of the PyTorch module (pooler=None, dropout=0)."""
    s, b, p, d = observed.shape
    B = b * p
    x = jnp.transpose(observed.reshape(s, B, d), (1, 0, 2)).reshape(B, s * d)

    def lin(v, wb):
        w, bias = wb
        return v @ w + bias

    h = jax.nn.relu(lin(x, params["mlp1"]))
    emb = lin(h, params["mlp2"])
    h2 = jax.nn.relu(lin(emb, params["sum1"]))
    summary = lin(h2, params["sum2"])
    rep = summary + oe_table[jnp.repeat(offset, p)]
    h3 = jax.nn.relu(lin(rep, params["dec1"]))
    decoded = lin(h3, params["dec2"])
    return jnp.transpose(decoded.reshape(b, p, future_len, d), (2, 0, 1, 3))


def reference_forward_kernelmath(observed, offset, fused, *, future_len):
    """Same folded bf16-operand / f32-accumulate / bf16-store math as the kernel."""
    s, b, p, d = observed.shape
    bf16 = jnp.bfloat16
    x = _flatten_inputs(observed)
    oe_rows = fused["oew5"][jnp.repeat(offset, p)].astype(bf16)

    def mm(v, w):
        return jnp.dot(v.astype(bf16), w, preferred_element_type=jnp.float32)

    h = jax.nn.relu(mm(x, fused["w1"]) + fused["b1"])
    h2 = jax.nn.relu(mm(h, fused["w23"]) + fused["b23"])
    h3 = jax.nn.relu(mm(h2, fused["w45"]) + fused["b45"] + oe_rows.astype(jnp.float32))
    out = (mm(h3, fused["w6"]) + fused["b6"]).astype(bf16)
    decoded = out[:, :fused["out_dim"]].astype(jnp.float32)
    return jnp.transpose(decoded.reshape(b, p, future_len, d), (2, 0, 1, 3))


# ---------------------------------------------------------------------------
if __name__ == "__main__":
    # small, module-consistent shapes
    seq_len, batch, npeople, data_dim = 8, 2, 4, 4
    nhid, nout, dec_nhid = 32, 32, 32     # nout even (sinusoidal offset encoding)
    future_len = 4
    max_offset_len = 64

    key = jax.random.PRNGKey(0)
    k_obs, k_par = jax.random.split(key)

    observed = jax.random.normal(
        k_obs, (seq_len, batch, npeople, data_dim), jnp.float32)
    offset = jnp.array([1, 3], dtype=jnp.int32)    # one offset per batch element

    params = make_params(k_par, seq_len, data_dim, nhid, nout, dec_nhid, future_len)
    oe_table = make_offset_encoding_table(nout, max_offset_len)
    fused = fold_params(params, oe_table)

    out = jax.block_until_ready(
        pallas_forward(observed, offset, fused, future_len=future_len))
    assert out.shape == (future_len, batch, npeople, data_dim), out.shape

    out_km = jax.block_until_ready(
        reference_forward_kernelmath(observed, offset, fused, future_len=future_len))
    out_f32 = jax.block_until_ready(
        reference_forward_module(observed, offset, params, oe_table,
                                 future_len=future_len))

    # Tight check against the kernel's own (folded, bf16-operand) math ...
    np.testing.assert_allclose(np.asarray(out), np.asarray(out_km), rtol=1e-2, atol=1e-2)
    # ... and a looser check against the faithful f32 module math (bf16 rounding budget).
    np.testing.assert_allclose(np.asarray(out), np.asarray(out_f32), rtol=5e-2, atol=5e-2)

    # TODO(synk): dropout layers (MLP dropout=0, FutureOffsetEncoder dropout p=0) are
    # identity in eval mode and therefore omitted from the kernel.
    print("KERNEL_OK")
</pallas_src>

<mosaic_0001>
module attributes {stable_mosaic.version = 11 : i64} {
  func.func @_fused_mlp_kernel(%arg0: i32, %arg1: memref<16x32xbf16, #tpu.memory_space<vmem>>, %arg2: memref<32x32xbf16, #tpu.memory_space<vmem>>, %arg3: memref<1x32xf32, #tpu.memory_space<vmem>>, %arg4: memref<32x32xbf16, #tpu.memory_space<vmem>>, %arg5: memref<1x32xf32, #tpu.memory_space<vmem>>, %arg6: memref<32x32xbf16, #tpu.memory_space<vmem>>, %arg7: memref<1x32xf32, #tpu.memory_space<vmem>>, %arg8: memref<16x32xbf16, #tpu.memory_space<vmem>>, %arg9: memref<32x128xbf16, #tpu.memory_space<vmem>>, %arg10: memref<1x128xf32, #tpu.memory_space<vmem>>, %arg11: memref<16x128xbf16, #tpu.memory_space<vmem>>) attributes {dimension_semantics = [#tpu.dimension_semantics<parallel>], iteration_bounds = array<i64: 1>, scalar_prefetch = 0 : i64, scratch_operands = 0 : i64, tpu.core_type = #tpu.core_type<tc>, window_params = [{transform_indices = @transform_0, window_bounds = array<i64: 16, 32>}, {pipeline_mode = #tpu.pipeline_mode<synchronous>, transform_indices = @transform_1, window_bounds = array<i64: 32, 32>}, {pipeline_mode = #tpu.pipeline_mode<synchronous>, transform_indices = @transform_2, window_bounds = array<i64: 1, 32>}, {pipeline_mode = #tpu.pipeline_mode<synchronous>, transform_indices = @transform_3, window_bounds = array<i64: 32, 32>}, {pipeline_mode = #tpu.pipeline_mode<synchronous>, transform_indices = @transform_4, window_bounds = array<i64: 1, 32>}, {pipeline_mode = #tpu.pipeline_mode<synchronous>, transform_indices = @transform_5, window_bounds = array<i64: 32, 32>}, {pipeline_mode = #tpu.pipeline_mode<synchronous>, transform_indices = @transform_6, window_bounds = array<i64: 1, 32>}, {transform_indices = @transform_7, window_bounds = array<i64: 16, 32>}, {pipeline_mode = #tpu.pipeline_mode<synchronous>, transform_indices = @transform_8, window_bounds = array<i64: 32, 128>}, {pipeline_mode = #tpu.pipeline_mode<synchronous>, transform_indices = @transform_9, window_bounds = array<i64: 1, 128>}, {transform_indices = @transform_10, window_bounds = array<i64: 16, 128>}]} {
    %c0 = arith.constant 0 : index
    %c0_0 = arith.constant 0 : index
    %0 = vector.load %arg1[%c0, %c0_0] : memref<16x32xbf16, #tpu.memory_space<vmem>>, vector<16x32xbf16>
    %c0_1 = arith.constant 0 : index
    %c0_2 = arith.constant 0 : index
    %1 = vector.load %arg2[%c0_1, %c0_2] : memref<32x32xbf16, #tpu.memory_space<vmem>>, vector<32x32xbf16>
    %cst = arith.constant dense<0.000000e+00> : vector<16x32xf32>
    %2 = tpu.matmul %0, %1, %cst {dimension_numbers = #tpu.dot_dimension_numbers<[1], [0], [0], [1], [0, 0, 1, 1], [], []>} : vector<16x32xbf16>, vector<32x32xbf16>, vector<16x32xf32> -> vector<16x32xf32>
    %c0_3 = arith.constant 0 : index
    %c0_4 = arith.constant 0 : index
    %3 = vector.load %arg3[%c0_3, %c0_4] : memref<1x32xf32, #tpu.memory_space<vmem>>, vector<1x32xf32>
    %4 = vector.broadcast %3 : vector<1x32xf32> to vector<16x32xf32>
    %5 = arith.addf %2, %4 : vector<16x32xf32>
    %cst_5 = arith.constant 0.000000e+00 : f32
    %6 = vector.broadcast %cst_5 : f32 to vector<16x32xf32>
    %7 = arith.maximumf %5, %6 : vector<16x32xf32>
    %8 = arith.truncf %7 : vector<16x32xf32> to vector<16x32xbf16>
    %c0_6 = arith.constant 0 : index
    %c0_7 = arith.constant 0 : index
    %9 = vector.load %arg4[%c0_6, %c0_7] : memref<32x32xbf16, #tpu.memory_space<vmem>>, vector<32x32xbf16>
    %cst_8 = arith.constant dense<0.000000e+00> : vector<16x32xf32>
    %10 = tpu.matmul %8, %9, %cst_8 {dimension_numbers = #tpu.dot_dimension_numbers<[1], [0], [0], [1], [0, 0, 1, 1], [], []>} : vector<16x32xbf16>, vector<32x32xbf16>, vector<16x32xf32> -> vector<16x32xf32>
    %c0_9 = arith.constant 0 : index
    %c0_10 = arith.constant 0 : index
    %11 = vector.load %arg5[%c0_9, %c0_10] : memref<1x32xf32, #tpu.memory_space<vmem>>, vector<1x32xf32>
    %12 = vector.broadcast %11 : vector<1x32xf32> to vector<16x32xf32>
    %13 = arith.addf %10, %12 : vector<16x32xf32>
    %cst_11 = arith.constant 0.000000e+00 : f32
    %14 = vector.broadcast %cst_11 : f32 to vector<16x32xf32>
    %15 = arith.maximumf %13, %14 : vector<16x32xf32>
    %16 = arith.truncf %15 : vector<16x32xf32> to vector<16x32xbf16>
    %c0_12 = arith.constant 0 : index
    %c0_13 = arith.constant 0 : index
    %17 = vector.load %arg6[%c0_12, %c0_13] : memref<32x32xbf16, #tpu.memory_space<vmem>>, vector<32x32xbf16>
    %cst_14 = arith.constant dense<0.000000e+00> : vector<16x32xf32>
    %18 = tpu.matmul %16, %17, %cst_14 {dimension_numbers = #tpu.dot_dimension_numbers<[1], [0], [0], [1], [0, 0, 1, 1], [], []>} : vector<16x32xbf16>, vector<32x32xbf16>, vector<16x32xf32> -> vector<16x32xf32>
    %c0_15 = arith.constant 0 : index
    %c0_16 = arith.constant 0 : index
    %19 = vector.load %arg7[%c0_15, %c0_16] : memref<1x32xf32, #tpu.memory_space<vmem>>, vector<1x32xf32>
    %20 = vector.broadcast %19 : vector<1x32xf32> to vector<16x32xf32>
    %21 = arith.addf %18, %20 : vector<16x32xf32>
    %c0_17 = arith.constant 0 : index
    %c0_18 = arith.constant 0 : index
    %22 = vector.load %arg8[%c0_17, %c0_18] : memref<16x32xbf16, #tpu.memory_space<vmem>>, vector<16x32xbf16>
    %23 = arith.extf %22 : vector<16x32xbf16> to vector<16x32xf32>
    %24 = arith.addf %21, %23 : vector<16x32xf32>
    %cst_19 = arith.constant 0.000000e+00 : f32
    %25 = vector.broadcast %cst_19 : f32 to vector<16x32xf32>
    %26 = arith.maximumf %24, %25 : vector<16x32xf32>
    %27 = arith.truncf %26 : vector<16x32xf32> to vector<16x32xbf16>
    %c0_20 = arith.constant 0 : index
    %c0_21 = arith.constant 0 : index
    %28 = vector.load %arg9[%c0_20, %c0_21] : memref<32x128xbf16, #tpu.memory_space<vmem>>, vector<32x128xbf16>
    %cst_22 = arith.constant dense<0.000000e+00> : vector<16x128xf32>
    %29 = tpu.matmul %27, %28, %cst_22 {dimension_numbers = #tpu.dot_dimension_numbers<[1], [0], [0], [1], [0, 0, 1, 1], [], []>} : vector<16x32xbf16>, vector<32x128xbf16>, vector<16x128xf32> -> vector<16x128xf32>
    %c0_23 = arith.constant 0 : index
    %c0_24 = arith.constant 0 : index
    %30 = vector.load %arg10[%c0_23, %c0_24] : memref<1x128xf32, #tpu.memory_space<vmem>>, vector<1x128xf32>
    %31 = vector.broadcast %30 : vector<1x128xf32> to vector<16x128xf32>
    %32 = arith.addf %29, %31 : vector<16x128xf32>
    %33 = arith.truncf %32 : vector<16x128xf32> to vector<16x128xbf16>
    %c0_25 = arith.constant 0 : index
    %c0_26 = arith.constant 0 : index
    %34 = vector.load %arg11[%c0_25, %c0_26] : memref<16x128xbf16, #tpu.memory_space<vmem>>, vector<16x128xbf16>
    tpu.vector_store %arg11[%c0_25, %c0_26], %33 {strides = array<i32>} : memref<16x128xbf16, #tpu.memory_space<vmem>>, vector<16x128xbf16>,
    return
  }
  func.func @transform_0(%arg0: i32) -> (i32, i32) {
    %c0_i32 = arith.constant 0 : i32
    %c0_i32_0 = arith.constant 0 : i32
    return %arg0, %c0_i32 : i32, i32
  }
  func.func @transform_1(%arg0: i32) -> (i32, i32) {
    %c0_i32 = arith.constant 0 : i32
    %c0_i32_0 = arith.constant 0 : i32
    %c0_i32_1 = arith.constant 0 : i32
    return %c0_i32, %c0_i32_0 : i32, i32
  }
  func.func @transform_2(%arg0: i32) -> (i32, i32) {
    %c0_i32 = arith.constant 0 : i32
    %c0_i32_0 = arith.constant 0 : i32
    %c0_i32_1 = arith.constant 0 : i32
    return %c0_i32, %c0_i32_0 : i32, i32
  }
  func.func @transform_3(%arg0: i32) -> (i32, i32) {
    %c0_i32 = arith.constant 0 : i32
    %c0_i32_0 = arith.constant 0 : i32
    %c0_i32_1 = arith.constant 0 : i32
    return %c0_i32, %c0_i32_0 : i32, i32
  }
  func.func @transform_4(%arg0: i32) -> (i32, i32) {
    %c0_i32 = arith.constant 0 : i32
    %c0_i32_0 = arith.constant 0 : i32
    %c0_i32_1 = arith.constant 0 : i32
    return %c0_i32, %c0_i32_0 : i32, i32
  }
  func.func @transform_5(%arg0: i32) -> (i32, i32) {
    %c0_i32 = arith.constant 0 : i32
    %c0_i32_0 = arith.constant 0 : i32
    %c0_i32_1 = arith.constant 0 : i32
    return %c0_i32, %c0_i32_0 : i32, i32
  }
  func.func @transform_6(%arg0: i32) -> (i32, i32) {
    %c0_i32 = arith.constant 0 : i32
    %c0_i32_0 = arith.constant 0 : i32
    %c0_i32_1 = arith.constant 0 : i32
    return %c0_i32, %c0_i32_0 : i32, i32
  }
  func.func @transform_7(%arg0: i32) -> (i32, i32) {
    %c0_i32 = arith.constant 0 : i32
    %c0_i32_0 = arith.constant 0 : i32
    return %arg0, %c0_i32 : i32, i32
  }
  func.func @transform_8(%arg0: i32) -> (i32, i32) {
    %c0_i32 = arith.constant 0 : i32
    %c0_i32_0 = arith.constant 0 : i32
    %c0_i32_1 = arith.constant 0 : i32
    return %c0_i32, %c0_i32_0 : i32, i32
  }
  func.func @transform_9(%arg0: i32) -> (i32, i32) {
    %c0_i32 = arith.constant 0 : i32
    %c0_i32_0 = arith.constant 0 : i32
    %c0_i32_1 = arith.constant 0 : i32
    return %c0_i32, %c0_i32_0 : i32, i32
  }
  func.func @transform_10(%arg0: i32) -> (i32, i32) {
    %c0_i32 = arith.constant 0 : i32
    %c0_i32_0 = arith.constant 0 : i32
    return %arg0, %c0_i32 : i32, i32
  }
}

module attributes {stable_mosaic.version = 11 : i64} {
  func.func @_fused_mlp_kernel(%arg0: i32, %arg1: memref<16x32xbf16, #tpu.memory_space<vmem>>, %arg2: memref<32x32xbf16, #tpu.memory_space<vmem>>, %arg3: memref<1x32xf32, #tpu.memory_space<vmem>>, %arg4: memref<32x32xbf16, #tpu.memory_space<vmem>>, %arg5: memref<1x32xf32, #tpu.memory_space<vmem>>, %arg6: memref<32x32xbf16, #tpu.memory_space<vmem>>, %arg7: memref<1x32xf32, #tpu.memory_space<vmem>>, %arg8: memref<16x32xbf16, #tpu.memory_space<vmem>>, %arg9: memref<32x128xbf16, #tpu.memory_space<vmem>>, %arg10: memref<1x128xf32, #tpu.memory_space<vmem>>, %arg11: memref<16x128xbf16, #tpu.memory_space<vmem>>) attributes {dimension_semantics = [#tpu.dimension_semantics<parallel>], iteration_bounds = array<i64: 1>, scalar_prefetch = 0 : i64, scratch_operands = 0 : i64, tpu.core_type = #tpu.core_type<tc>, window_params = [{transform_indices = @transform_0, window_bounds = array<i64: 16, 32>}, {pipeline_mode = #tpu.pipeline_mode<synchronous>, transform_indices = @transform_1, window_bounds = array<i64: 32, 32>}, {pipeline_mode = #tpu.pipeline_mode<synchronous>, transform_indices = @transform_2, window_bounds = array<i64: 1, 32>}, {pipeline_mode = #tpu.pipeline_mode<synchronous>, transform_indices = @transform_3, window_bounds = array<i64: 32, 32>}, {pipeline_mode = #tpu.pipeline_mode<synchronous>, transform_indices = @transform_4, window_bounds = array<i64: 1, 32>}, {pipeline_mode = #tpu.pipeline_mode<synchronous>, transform_indices = @transform_5, window_bounds = array<i64: 32, 32>}, {pipeline_mode = #tpu.pipeline_mode<synchronous>, transform_indices = @transform_6, window_bounds = array<i64: 1, 32>}, {transform_indices = @transform_7, window_bounds = array<i64: 16, 32>}, {pipeline_mode = #tpu.pipeline_mode<synchronous>, transform_indices = @transform_8, window_bounds = array<i64: 32, 128>}, {pipeline_mode = #tpu.pipeline_mode<synchronous>, transform_indices = @transform_9, window_bounds = array<i64: 1, 128>}, {transform_indices = @transform_10, window_bounds = array<i64: 16, 128>}]} {
    %c0 = arith.constant 0 : index
    %c0_0 = arith.constant 0 : index
    %0 = vector.load %arg1[%c0, %c0_0] : memref<16x32xbf16, #tpu.memory_space<vmem>>, vector<16x32xbf16>
    %c0_1 = arith.constant 0 : index
    %c0_2 = arith.constant 0 : index
    %1 = vector.load %arg2[%c0_1, %c0_2] : memref<32x32xbf16, #tpu.memory_space<vmem>>, vector<32x32xbf16>
    %cst = arith.constant dense<0.000000e+00> : vector<16x32xf32>
    %2 = tpu.matmul %0, %1, %cst {dimension_numbers = #tpu.dot_dimension_numbers<[1], [0], [0], [1], [0, 0, 1, 1], [], []>} : vector<16x32xbf16>, vector<32x32xbf16>, vector<16x32xf32> -> vector<16x32xf32>
    %c0_3 = arith.constant 0 : index
    %c0_4 = arith.constant 0 : index
    %3 = vector.load %arg3[%c0_3, %c0_4] : memref<1x32xf32, #tpu.memory_space<vmem>>, vector<1x32xf32>
    %4 = vector.broadcast %3 : vector<1x32xf32> to vector<16x32xf32>
    %5 = arith.addf %2, %4 : vector<16x32xf32>
    %cst_5 = arith.constant 0.000000e+00 : f32
    %6 = vector.broadcast %cst_5 : f32 to vector<16x32xf32>
    %7 = arith.maximumf %5, %6 : vector<16x32xf32>
    %8 = arith.truncf %7 : vector<16x32xf32> to vector<16x32xbf16>
    %c0_6 = arith.constant 0 : index
    %c0_7 = arith.constant 0 : index
    %9 = vector.load %arg4[%c0_6, %c0_7] : memref<32x32xbf16, #tpu.memory_space<vmem>>, vector<32x32xbf16>
    %cst_8 = arith.constant dense<0.000000e+00> : vector<16x32xf32>
    %10 = tpu.matmul %8, %9, %cst_8 {dimension_numbers = #tpu.dot_dimension_numbers<[1], [0], [0], [1], [0, 0, 1, 1], [], []>} : vector<16x32xbf16>, vector<32x32xbf16>, vector<16x32xf32> -> vector<16x32xf32>
    %c0_9 = arith.constant 0 : index
    %c0_10 = arith.constant 0 : index
    %11 = vector.load %arg5[%c0_9, %c0_10] : memref<1x32xf32, #tpu.memory_space<vmem>>, vector<1x32xf32>
    %12 = vector.broadcast %11 : vector<1x32xf32> to vector<16x32xf32>
    %13 = arith.addf %10, %12 : vector<16x32xf32>
    %cst_11 = arith.constant 0.000000e+00 : f32
    %14 = vector.broadcast %cst_11 : f32 to vector<16x32xf32>
    %15 = arith.maximumf %13, %14 : vector<16x32xf32>
    %16 = arith.truncf %15 : vector<16x32xf32> to vector<16x32xbf16>
    %c0_12 = arith.constant 0 : index
    %c0_13 = arith.constant 0 : index
    %17 = vector.load %arg6[%c0_12, %c0_13] : memref<32x32xbf16, #tpu.memory_space<vmem>>, vector<32x32xbf16>
    %cst_14 = arith.constant dense<0.000000e+00> : vector<16x32xf32>
    %18 = tpu.matmul %16, %17, %cst_14 {dimension_numbers = #tpu.dot_dimension_numbers<[1], [0], [0], [1], [0, 0, 1, 1], [], []>} : vector<16x32xbf16>, vector<32x32xbf16>, vector<16x32xf32> -> vector<16x32xf32>
    %c0_15 = arith.constant 0 : index
    %c0_16 = arith.constant 0 : index
    %19 = vector.load %arg7[%c0_15, %c0_16] : memref<1x32xf32, #tpu.memory_space<vmem>>, vector<1x32xf32>
    %20 = vector.broadcast %19 : vector<1x32xf32> to vector<16x32xf32>
    %21 = arith.addf %18, %20 : vector<16x32xf32>
    %c0_17 = arith.constant 0 : index
    %c0_18 = arith.constant 0 : index
    %22 = vector.load %arg8[%c0_17, %c0_18] : memref<16x32xbf16, #tpu.memory_space<vmem>>, vector<16x32xbf16>
    %23 = arith.extf %22 : vector<16x32xbf16> to vector<16x32xf32>
    %24 = arith.addf %21, %23 : vector<16x32xf32>
    %cst_19 = arith.constant 0.000000e+00 : f32
    %25 = vector.broadcast %cst_19 : f32 to vector<16x32xf32>
    %26 = arith.maximumf %24, %25 : vector<16x32xf32>
    %27 = arith.truncf %26 : vector<16x32xf32> to vector<16x32xbf16>
    %c0_20 = arith.constant 0 : index
    %c0_21 = arith.constant 0 : index
    %28 = vector.load %arg9[%c0_20, %c0_21] : memref<32x128xbf16, #tpu.memory_space<vmem>>, vector<32x128xbf16>
    %cst_22 = arith.constant dense<0.000000e+00> : vector<16x128xf32>
    %29 = tpu.matmul %27, %28, %cst_22 {dimension_numbers = #tpu.dot_dimension_numbers<[1], [0], [0], [1], [0, 0, 1, 1], [], []>} : vector<16x32xbf16>, vector<32x128xbf16>, vector<16x128xf32> -> vector<16x128xf32>
    %c0_23 = arith.constant 0 : index
    %c0_24 = arith.constant 0 : index
    %30 = vector.load %arg10[%c0_23, %c0_24] : memref<1x128xf32, #tpu.memory_space<vmem>>, vector<1x128xf32>
    %31 = vector.broadcast %30 : vector<1x128xf32> to vector<16x128xf32>
    %32 = arith.addf %29, %31 : vector<16x128xf32>
    %33 = arith.truncf %32 : vector<16x128xf32> to vector<16x128xbf16>
    %c0_25 = arith.constant 0 : index
    %c0_26 = arith.constant 0 : index
    %34 = vector.load %arg11[%c0_25, %c0_26] : memref<16x128xbf16, #tpu.memory_space<vmem>>, vector<16x128xbf16>
    tpu.vector_store %arg11[%c0_25, %c0_26], %33 {strides = array<i32>} : memref<16x128xbf16, #tpu.memory_space<vmem>>, vector<16x128xbf16>,
    return
  }
  func.func @transform_0(%arg0: i32) -> (i32, i32) {
    %c0_i32 = arith.constant 0 : i32
    %c0_i32_0 = arith.constant 0 : i32
    return %arg0, %c0_i32 : i32, i32
  }
  func.func @transform_1(%arg0: i32) -> (i32, i32) {
    %c0_i32 = arith.constant 0 : i32
    %c0_i32_0 = arith.constant 0 : i32
    %c0_i32_1 = arith.constant 0 : i32
    return %c0_i32, %c0_i32_0 : i32, i32
  }
  func.func @transform_2(%arg0: i32) -> (i32, i32) {
    %c0_i32 = arith.constant 0 : i32
    %c0_i32_0 = arith.constant 0 : i32
    %c0_i32_1 = arith.constant 0 : i32
    return %c0_i32, %c0_i32_0 : i32, i32
  }
  func.func @transform_3(%arg0: i32) -> (i32, i32) {
    %c0_i32 = arith.constant 0 : i32
    %c0_i32_0 = arith.constant 0 : i32
    %c0_i32_1 = arith.constant 0 : i32
    return %c0_i32, %c0_i32_0 : i32, i32
  }
  func.func @transform_4(%arg0: i32) -> (i32, i32) {
    %c0_i32 = arith.constant 0 : i32
    %c0_i32_0 = arith.constant 0 : i32
    %c0_i32_1 = arith.constant 0 : i32
    return %c0_i32, %c0_i32_0 : i32, i32
  }
  func.func @transform_5(%arg0: i32) -> (i32, i32) {
    %c0_i32 = arith.constant 0 : i32
    %c0_i32_0 = arith.constant 0 : i32
    %c0_i32_1 = arith.constant 0 : i32
    return %c0_i32, %c0_i32_0 : i32, i32
  }
  func.func @transform_6(%arg0: i32) -> (i32, i32) {
    %c0_i32 = arith.constant 0 : i32
    %c0_i32_0 = arith.constant 0 : i32
    %c0_i32_1 = arith.constant 0 : i32
    return %c0_i32, %c0_i32_0 : i32, i32
  }
  func.func @transform_7(%arg0: i32) -> (i32, i32) {
    %c0_i32 = arith.constant 0 : i32
    %c0_i32_0 = arith.constant 0 : i32
    return %arg0, %c0_i32 : i32, i32
  }
  func.func @transform_8(%arg0: i32) -> (i32, i32) {
    %c0_i32 = arith.constant 0 : i32
    %c0_i32_0 = arith.constant 0 : i32
    %c0_i32_1 = arith.constant 0 : i32
    return %c0_i32, %c0_i32_0 : i32, i32
  }
  func.func @transform_9(%arg0: i32) -> (i32, i32) {
    %c0_i32 = arith.constant 0 : i32
    %c0_i32_0 = arith.constant 0 : i32
    %c0_i32_1 = arith.constant 0 : i32
    return %c0_i32, %c0_i32_0 : i32, i32
  }
  func.func @transform_10(%arg0: i32) -> (i32, i32) {
    %c0_i32 = arith.constant 0 : i32
    %c0_i32_0 = arith.constant 0 : i32
    return %arg0, %c0_i32 : i32, i32
  }
}

</mosaic_0001>

<llo_original>
// kernel: tpu_custom_call.1
$region0: #{tpu_custom_call.1}
  #allocation0 [shape = 'u32[]', space=smem, size = 0x4, offset = 0x4, fixed_abs, tag = 'smem constant byte address 0x4 - core index']
  #allocation1 [shape = 'u32[144,128]{1,0:T(1,128)}', space=vmem, size = 0x12000, scoped, tag = 'internal scratch']
  %s0 = inlined_call_operand.hbm [shape: bf16[16,32], index: 0, kind: input, shape index: {}]
  %s1 = inlined_call_operand.hbm [shape: bf16[32,32], index: 1, kind: input, shape index: {}]
  %s2 = inlined_call_operand.vmem [shape: f32[1,32], index: 2, kind: input, shape index: {}]
  %s3 = inlined_call_operand.hbm [shape: bf16[32,32], index: 3, kind: input, shape index: {}]
  %s4 = inlined_call_operand.vmem [shape: f32[1,32], index: 4, kind: input, shape index: {}]
  %s5 = inlined_call_operand.vmem [shape: bf16[32,32], index: 5, kind: input, shape index: {}]
  %s6 = inlined_call_operand.hbm [shape: f32[1,32], index: 6, kind: input, shape index: {}]
  %s7 = inlined_call_operand.vmem [shape: bf16[16,32], index: 7, kind: input, shape index: {}]
  %s8 = inlined_call_operand.hbm [shape: bf16[32,128], index: 8, kind: input, shape index: {}]
  %s9 = inlined_call_operand.vmem [shape: f32[1,128], index: 9, kind: input, shape index: {}]
  %s10 = inlined_call_operand.hbm [shape: bf16[16,128], index: 10, kind: output, shape index: {}]
  %s11 = sld [smem:[#allocation0]]
  $region70: #{tpu_custom_call.1} parent=0
    _
  %s13 = ssub.s32 1, %s11
  %s14 = scalar_select 0, %s13, %s11
  $region1: #{tpu_custom_call.1} parent=0
    #allocation2 [shape = 'u8[4096]{0}', space=vmem, size = 0x1000, scoped, tag = 'input window, operand 0, single buffered']
    #allocation3 [shape = 's32[1]{0}', space=sflag, size = 0x4, scoped, tag = 'scoped memory for tpu_custom_call.1']
    #allocation4 [shape = 's32[1]{0}', space=sflag, size = 0x4, scoped, tag = 'scoped memory for tpu_custom_call.1']
    #allocation5 [shape = 'u8[8192]{0}', space=vmem, size = 0x2000, scoped, tag = 'input window, operand 1, single buffered']
    #allocation6 [shape = 's32[1]{0}', space=sflag, size = 0x4, scoped, tag = 'scoped memory for tpu_custom_call.1']
    #allocation7 [shape = 'u8[8192]{0}', space=vmem, size = 0x2000, scoped, tag = 'input window, operand 3, single buffered']
    #allocation8 [shape = 'u8[512]{0}', space=vmem, size = 0x400, scoped, tag = 'input window, operand 6, single buffered']
    #allocation9 [shape = 's32[1]{0}', space=sflag, size = 0x4, scoped, tag = 'scoped memory for tpu_custom_call.1']
    #allocation10 [shape = 'u8[8192]{0}', space=vmem, size = 0x2000, scoped, tag = 'input window, operand 8, single buffered']
    #allocation11 [shape = 'u8[4096]{0}', space=vmem, size = 0x1000, scoped, tag = 'output window, operand 0, single buffered']
    %15 = vsyncpa [#allocation3], 0
    %16 = vsyncpa [#allocation6], 0
    %17 = vsyncpa [#allocation9], 0
    %18 = vsyncpa [#allocation4], 0
    // Predicated region
    $region2: #{tpu_custom_call.1} parent=1 // pred_check
      _
    $region3: #{tpu_custom_call.1} parent=1 // pred_check_branch
      %20 = sbr.rel (0) target = $region5
    $region4: #{tpu_custom_call.1} parent=1 // pred_region
      %s22 = ssub.s32 128, 128
      %23 = vsyncadd [#allocation3], %s22
      %s24 = sshll.u32 [#allocation2], 4
      %s25 = int_to_ptr.vmem [resolvable:$true] %s24
      %30 = dma.hbm_to_vmem [thread:$0]  %s0, 128, %s25, [#allocation3], 64, 64, 4
    $region5: #{tpu_custom_call.1} parent=1 // pred_fallthru
      _
    // Predicated region
    $region6: #{tpu_custom_call.1} parent=1 // pred_check
      _
    $region7: #{tpu_custom_call.1} parent=1 // pred_check_branch
      %32 = sbr.rel (0) target = $region9
    $region8: #{tpu_custom_call.1} parent=1 // pred_region
      %s34 = ssub.s32 256, 256
      %35 = vsyncadd [#allocation6], %s34
      %s36 = sshll.u32 [#allocation5], 4
      %s37 = int_to_ptr.vmem [resolvable:$true] %s36
      %42 = dma.hbm_to_vmem [thread:$0]  %s1, 256, %s37, [#allocation6], 64, 64, 4
    $region9: #{tpu_custom_call.1} parent=1 // pred_fallthru
      _
    // Predicated region
    $region10: #{tpu_custom_call.1} parent=1 // pred_check
      _
    $region11: #{tpu_custom_call.1} parent=1 // pred_check_branch
      %44 = sbr.rel (0) target = $region13
    $region12: #{tpu_custom_call.1} parent=1 // pred_region
      _
    $region13: #{tpu_custom_call.1} parent=1 // pred_fallthru
      _
    // Predicated region
    $region14: #{tpu_custom_call.1} parent=1 // pred_check
      _
    $region15: #{tpu_custom_call.1} parent=1 // pred_check_branch
      %46 = sbr.rel (0) target = $region17
    $region16: #{tpu_custom_call.1} parent=1 // pred_region
      %s48 = ssub.s32 256, 256
      %49 = vsyncadd [#allocation6], %s48
      %s50 = sshll.u32 [#allocation7], 4
      %s51 = int_to_ptr.vmem [resolvable:$true] %s50
      %56 = dma.hbm_to_vmem [thread:$0]  %s3, 256, %s51, [#allocation6], 64, 64, 4
    $region17: #{tpu_custom_call.1} parent=1 // pred_fallthru
      _
    // Predicated region
    $region18: #{tpu_custom_call.1} parent=1 // pred_check
      _
    $region19: #{tpu_custom_call.1} parent=1 // pred_check_branch
      %58 = sbr.rel (0) target = $region21
    $region20: #{tpu_custom_call.1} parent=1 // pred_region
      _
    $region21: #{tpu_custom_call.1} parent=1 // pred_fallthru
      _
    // Predicated region
    $region22: #{tpu_custom_call.1} parent=1 // pred_check
      _
    $region23: #{tpu_custom_call.1} parent=1 // pred_check_branch
      %60 = sbr.rel (0) target = $region25
    $region24: #{tpu_custom_call.1} parent=1 // pred_region
      _
    $region25: #{tpu_custom_call.1} parent=1 // pred_fallthru
      _
    // Predicated region
    $region26: #{tpu_custom_call.1} parent=1 // pred_check
      _
    $region27: #{tpu_custom_call.1} parent=1 // pred_check_branch
      %62 = sbr.rel (0) target = $region29
    $region28: #{tpu_custom_call.1} parent=1 // pred_region
      %s64 = ssub.s32 16, 16
      %65 = vsyncadd [#allocation9], %s64
      %s67 = sshll.u32 [#allocation8], 4
      %s68 = int_to_ptr.vmem [resolvable:$true] %s67
      %70 = dma.hbm_to_vmem [thread:$0]  %s6, 16, %s68, [#allocation9]
    $region29: #{tpu_custom_call.1} parent=1 // pred_fallthru
      _
    // Predicated region
    $region30: #{tpu_custom_call.1} parent=1 // pred_check
      _
    $region31: #{tpu_custom_call.1} parent=1 // pred_check_branch
      %72 = sbr.rel (0) target = $region33
    $region32: #{tpu_custom_call.1} parent=1 // pred_region
      _
    $region33: #{tpu_custom_call.1} parent=1 // pred_fallthru
      _
    // Predicated region
    $region34: #{tpu_custom_call.1} parent=1 // pred_check
      _
    $region35: #{tpu_custom_call.1} parent=1 // pred_check_branch
      %74 = sbr.rel (0) target = $region37
    $region36: #{tpu_custom_call.1} parent=1 // pred_region
      %s76 = ssub.s32 256, 256
      %77 = vsyncadd [#allocation9], %s76
      %s78 = sshll.u32 [#allocation10], 4
      %s79 = int_to_ptr.vmem [resolvable:$true] %s78
      %84 = dma.hbm_to_vmem [thread:$0]  %s8, 256, %s79, [#allocation9], 64, 64, 4
    $region37: #{tpu_custom_call.1} parent=1 // pred_fallthru
      _
    // Predicated region
    $region38: #{tpu_custom_call.1} parent=1 // pred_check
      _
    $region39: #{tpu_custom_call.1} parent=1 // pred_check_branch
      %86 = sbr.rel (0) target = $region41
    $region40: #{tpu_custom_call.1} parent=1 // pred_region
      _
    $region41: #{tpu_custom_call.1} parent=1 // pred_fallthru
      _
    // Predicated region
    $region42: #{tpu_custom_call.1} parent=1 // pred_check
      _
    $region43: #{tpu_custom_call.1} parent=1 // pred_check_branch
      %88 = sbr.rel (0) target = $region45
    $region44: #{tpu_custom_call.1} parent=1 // pred_region
      %89 = dma.done [#allocation3], 128
    $region45: #{tpu_custom_call.1} parent=1 // pred_fallthru
      _
    // Predicated region
    $region46: #{tpu_custom_call.1} parent=1 // pred_check
      _
    $region47: #{tpu_custom_call.1} parent=1 // pred_check_branch
      %91 = sbr.rel (0) target = $region49
    $region48: #{tpu_custom_call.1} parent=1 // pred_region
      %92 = dma.done [#allocation6], 256
    $region49: #{tpu_custom_call.1} parent=1 // pred_fallthru
      _
    // Predicated region
    $region50: #{tpu_custom_call.1} parent=1 // pred_check
      _
    $region51: #{tpu_custom_call.1} parent=1 // pred_check_branch
      %94 = sbr.rel (0) target = $region53
    $region52: #{tpu_custom_call.1} parent=1 // pred_region
      %95 = dma.done [#allocation6], 256
    $region53: #{tpu_custom_call.1} parent=1 // pred_fallthru
      _
    // Predicated region
    $region54: #{tpu_custom_call.1} parent=1 // pred_check
      _
    $region55: #{tpu_custom_call.1} parent=1 // pred_check_branch
      %97 = sbr.rel (0) target = $region57
    $region56: #{tpu_custom_call.1} parent=1 // pred_region
      %98 = dma.done [#allocation9], 16
    $region57: #{tpu_custom_call.1} parent=1 // pred_fallthru
      _
    // Predicated region
    $region58: #{tpu_custom_call.1} parent=1 // pred_check
      _
    $region59: #{tpu_custom_call.1} parent=1 // pred_check_branch
      %100 = sbr.rel (0) target = $region61
    $region60: #{tpu_custom_call.1} parent=1 // pred_region
      %101 = dma.done [#allocation9], 256
    $region61: #{tpu_custom_call.1} parent=1 // pred_fallthru
      _
    %v103 = vld [vmem:[#allocation2] sm:$0xf]
    %v104 = vld [vmem:[#allocation2 + $0x4] sm:$0xf]
    %v105 = vld [vmem:[#allocation5] sm:$0xf]
    %v106 = vld [vmem:[#allocation5 + $0x4] sm:$0xf]
    %v107 = vld [vmem:[#allocation5 + $0x8] sm:$0xf]
    %v108 = vld [vmem:[#allocation5 + $0xc] sm:$0xf]
    %v109 = vld [vmem:[%s2] sm:$0x1]
    %v111 = vlaneseq
    %v112 = vshrl.u32 %v111, 7
    %v113 = vsub.s32 0, %v112
    %v114 = vrot.slane %v109, %v113
    %v118 = vunpack.c.l.b16 %v103
    %v119 = vunpack.c.l.b16 %v104
    %v120 = vpack.c.b16 %v119, %v118
    %v125 = vunpack.c.l.b16 %v105
    %v126 = vunpack.c.l.b16 %v106
    %v127 = vunpack.c.l.b16 %v107
    %v128 = vunpack.c.l.b16 %v108
    %v129 = vpack.c.b16 %v126, %v125
    %v130 = vpack.c.b16 %v128, %v127
    %vm133 = vcmask 261120
    %v135 = vsel %vm133, %v120, 0
    %137 = vmatprep.subr.bf16.mxu0 0
    %138 = vmatpush1.bf16.msra.mxu0 %v129
    %139 = vmatprep.subr.bf16.mxu0 0
    %140 = vmatpush1.bf16.msra.mxu0 %v130
    %141 = vmatprep.subr.bf16.mxu0 0
    %142 = vmatpush1.bf16.msra.mxu0 0
    %143 = vmatprep.subr.bf16.mxu0 0
    %144 = vmatpush1.bf16.msra.mxu0 0
    %145 = vmatprep.subr.bf16.mxu0 0
    %146 = vmatpush1.bf16.msra.mxu0 0
    %147 = vmatprep.subr.bf16.mxu0 0
    %148 = vmatpush1.bf16.msra.mxu0 0
    %149 = vmatprep.subr.bf16.mxu0 0
    %150 = vmatpush1.bf16.msra.mxu0 0
    %151 = vmatprep.subr.bf16.mxu0 0
    %152 = vmatpush1.bf16.msra.mxu0 0
    %153 = vmatprep.subr.bf16.mxu0 0
    %154 = vmatpush1.bf16.msra.mxu0 0
    %155 = vmatprep.subr.bf16.mxu0 0
    %156 = vmatpush1.bf16.msra.mxu0 0
    %157 = vmatprep.subr.bf16.mxu0 0
    %158 = vmatpush1.bf16.msra.mxu0 0
    %159 = vmatprep.subr.bf16.mxu0 0
    %160 = vmatpush1.bf16.msra.mxu0 0
    %161 = vmatprep.subr.bf16.mxu0 0
    %162 = vmatpush1.bf16.msra.mxu0 0
    %163 = vmatprep.subr.bf16.mxu0 0
    %164 = vmatpush1.bf16.msra.mxu0 0
    %165 = vmatprep.subr.bf16.mxu0 0
    %166 = vmatpush1.bf16.msra.mxu0 0
    %167 = vmatprep.subr.bf16.mxu0 0
    %168 = vmatpush1.bf16.msra.mxu0 0
    %169 = vmatprep.mubr.bf16.mxu0 0
    %170 = vmatmul.mubr.bf16.gmra.mrb[0].mxu0 %v135
    %v171 = vpop.f32.mrb[0].mxu0
    %v172 = vadd.f32 %v114, %v171
    %v173 = vpop.f32.mrb[0].mxu0
    %v174 = vpop.f32.mrb[0].mxu0
    %v175 = vadd.f32 %v114, %v174
    %v176 = vpop.f32.mrb[0].mxu0
    %177 = vdwg.mxu0
    %v178 = vmax.f32 %v172, 0.0
    %v179 = vmax.f32 %v175, 0.0
    %v180 = vpack.c.bf16 %v179, %v178
    %v181 = vld [vmem:[#allocation7] sm:$0xf]
    %v182 = vld [vmem:[#allocation7 + $0x4] sm:$0xf]
    %v183 = vld [vmem:[#allocation7 + $0x8] sm:$0xf]
    %v184 = vld [vmem:[#allocation7 + $0xc] sm:$0xf]
    %v185 = vld [vmem:[%s4] sm:$0x1]
    %v187 = vlaneseq
    %v188 = vshrl.u32 %v187, 7
    %v189 = vsub.s32 0, %v188
    %v190 = vrot.slane %v185, %v189
    %v196 = vunpack.c.l.b16 %v181
    %v197 = vunpack.c.l.b16 %v182
    %v198 = vunpack.c.l.b16 %v183
    %v199 = vunpack.c.l.b16 %v184
    %v200 = vpack.c.b16 %v197, %v196
    %v201 = vpack.c.b16 %v199, %v198
    %v205 = vsel %vm133, %v180, 0
    %207 = vmatprep.subr.bf16.mxu0 0
    %208 = vmatpush1.bf16.msra.mxu0 %v200
    %209 = vmatprep.subr.bf16.mxu0 0
    %210 = vmatpush1.bf16.msra.mxu0 %v201
    %211 = vmatprep.subr.bf16.mxu0 0
    %212 = vmatpush1.bf16.msra.mxu0 0
    %213 = vmatprep.subr.bf16.mxu0 0
    %214 = vmatpush1.bf16.msra.mxu0 0
    %215 = vmatprep.subr.bf16.mxu0 0
    %216 = vmatpush1.bf16.msra.mxu0 0
    %217 = vmatprep.subr.bf16.mxu0 0
    %218 = vmatpush1.bf16.msra.mxu0 0
    %219 = vmatprep.subr.bf16.mxu0 0
    %220 = vmatpush1.bf16.msra.mxu0 0
    %221 = vmatprep.subr.bf16.mxu0 0
    %222 = vmatpush1.bf16.msra.mxu0 0
    %223 = vmatprep.subr.bf16.mxu0 0
    %224 = vmatpush1.bf16.msra.mxu0 0
    %225 = vmatprep.subr.bf16.mxu0 0
    %226 = vmatpush1.bf16.msra.mxu0 0
    %227 = vmatprep.subr.bf16.mxu0 0
    %228 = vmatpush1.bf16.msra.mxu0 0
    %229 = vmatprep.subr.bf16.mxu0 0
    %230 = vmatpush1.bf16.msra.mxu0 0
    %231 = vmatprep.subr.bf16.mxu0 0
    %232 = vmatpush1.bf16.msra.mxu0 0
    %233 = vmatprep.subr.bf16.mxu0 0
    %234 = vmatpush1.bf16.msra.mxu0 0
    %235 = vmatprep.subr.bf16.mxu0 0
    %236 = vmatpush1.bf16.msra.mxu0 0
    %237 = vmatprep.subr.bf16.mxu0 0
    %238 = vmatpush1.bf16.msra.mxu0 0
    %239 = vmatprep.mubr.bf16.mxu0 0
    %240 = vmatmul.mubr.bf16.gmra.mrb[0].mxu0 %v205
    %v241 = vpop.f32.mrb[0].mxu0
    %v242 = vadd.f32 %v190, %v241
    %v243 = vpop.f32.mrb[0].mxu0
    %v244 = vpop.f32.mrb[0].mxu0
    %v245 = vadd.f32 %v190, %v244
    %v246 = vpop.f32.mrb[0].mxu0
    %247 = vdwg.mxu0
    %v248 = vmax.f32 %v242, 0.0
    %v249 = vmax.f32 %v245, 0.0
    %v250 = vpack.c.bf16 %v249, %v248
    %v251 = vld [vmem:[%s5] sm:$0xf]
    %v252 = vld [vmem:[%s5 + $0x4] sm:$0xf]
    %v253 = vld [vmem:[%s5 + $0x8] sm:$0xf]
    %v254 = vld [vmem:[%s5 + $0xc] sm:$0xf]
    %v255 = vld [vmem:[#allocation8] sm:$0x1]
    %v257 = vlaneseq
    %v258 = vshrl.u32 %v257, 7
    %v259 = vsub.s32 0, %v258
    %v260 = vrot.slane %v255, %v259
    %v266 = vunpack.c.l.b16 %v251
    %v267 = vunpack.c.l.b16 %v252
    %v268 = vunpack.c.l.b16 %v253
    %v269 = vunpack.c.l.b16 %v254
    %v270 = vpack.c.b16 %v267, %v266
    %v271 = vpack.c.b16 %v269, %v268
    %v275 = vsel %vm133, %v250, 0
    %277 = vmatprep.subr.bf16.mxu0 0
    %278 = vmatpush1.bf16.msra.mxu0 %v270
    %279 = vmatprep.subr.bf16.mxu0 0
    %280 = vmatpush1.bf16.msra.mxu0 %v271
    %281 = vmatprep.subr.bf16.mxu0 0
    %282 = vmatpush1.bf16.msra.mxu0 0
    %283 = vmatprep.subr.bf16.mxu0 0
    %284 = vmatpush1.bf16.msra.mxu0 0
    %285 = vmatprep.subr.bf16.mxu0 0
    %286 = vmatpush1.bf16.msra.mxu0 0
    %287 = vmatprep.subr.bf16.mxu0 0
    %288 = vmatpush1.bf16.msra.mxu0 0
    %289 = vmatprep.subr.bf16.mxu0 0
    %290 = vmatpush1.bf16.msra.mxu0 0
    %291 = vmatprep.subr.bf16.mxu0 0
    %292 = vmatpush1.bf16.msra.mxu0 0
    %293 = vmatprep.subr.bf16.mxu0 0
    %294 = vmatpush1.bf16.msra.mxu0 0
    %295 = vmatprep.subr.bf16.mxu0 0
    %296 = vmatpush1.bf16.msra.mxu0 0
    %297 = vmatprep.subr.bf16.mxu0 0
    %298 = vmatpush1.bf16.msra.mxu0 0
    %299 = vmatprep.subr.bf16.mxu0 0
    %300 = vmatpush1.bf16.msra.mxu0 0
    %301 = vmatprep.subr.bf16.mxu0 0
    %302 = vmatpush1.bf16.msra.mxu0 0
    %303 = vmatprep.subr.bf16.mxu0 0
    %304 = vmatpush1.bf16.msra.mxu0 0
    %305 = vmatprep.subr.bf16.mxu0 0
    %306 = vmatpush1.bf16.msra.mxu0 0
    %307 = vmatprep.subr.bf16.mxu0 0
    %308 = vmatpush1.bf16.msra.mxu0 0
    %309 = vmatprep.mubr.bf16.mxu0 0
    %310 = vmatmul.mubr.bf16.gmra.mrb[0].mxu0 %v275
    %v311 = vpop.f32.mrb[0].mxu0
    %v312 = vadd.f32 %v260, %v311
    %v313 = vpop.f32.mrb[0].mxu0
    %v314 = vpop.f32.mrb[0].mxu0
    %v315 = vadd.f32 %v260, %v314
    %v316 = vpop.f32.mrb[0].mxu0
    %317 = vdwg.mxu0
    %v318 = vld [vmem:[%s7] sm:$0xf]
    %v319 = vld [vmem:[%s7 + $0x4] sm:$0xf]
    %v320 = vunpack.c.l.bf16 %v318
    %v321 = vunpack.c.l.bf16 %v319
    %v322 = vadd.f32 %v312, %v320
    %v323 = vadd.f32 %v315, %v321
    %v324 = vmax.f32 %v322, 0.0
    %v325 = vmax.f32 %v323, 0.0
    %v326 = vpack.c.bf16 %v325, %v324
    %v327 = vld [vmem:[#allocation10] sm:$0xf]
    %v328 = vld [vmem:[#allocation10 + $0x4] sm:$0xf]
    %v329 = vld [vmem:[#allocation10 + $0x8] sm:$0xf]
    %v330 = vld [vmem:[#allocation10 + $0xc] sm:$0xf]
    %v331 = vld [vmem:[%s9] sm:$0x1]
    %v333 = vlaneseq
    %v334 = vshrl.u32 %v333, 7
    %v335 = vsub.s32 0, %v334
    %v336 = vrot.slane %v331, %v335
    %v342 = vunpack.c.l.b16 %v327
    %v343 = vunpack.c.l.b16 %v328
    %v344 = vunpack.c.l.b16 %v329
    %v345 = vunpack.c.l.b16 %v330
    %v346 = vpack.c.b16 %v343, %v342
    %v347 = vpack.c.b16 %v345, %v344
    %v351 = vsel %vm133, %v326, 0
    %353 = vmatprep.subr.bf16.mxu0 0
    %354 = vmatpush1.bf16.msra.mxu0 %v346
    %355 = vmatprep.subr.bf16.mxu0 0
    %356 = vmatpush1.bf16.msra.mxu0 %v347
    %357 = vmatprep.subr.bf16.mxu0 0
    %358 = vmatpush1.bf16.msra.mxu0 0
    %359 = vmatprep.subr.bf16.mxu0 0
    %360 = vmatpush1.bf16.msra.mxu0 0
    %361 = vmatprep.subr.bf16.mxu0 0
    %362 = vmatpush1.bf16.msra.mxu0 0
    %363 = vmatprep.subr.bf16.mxu0 0
    %364 = vmatpush1.bf16.msra.mxu0 0
    %365 = vmatprep.subr.bf16.mxu0 0
    %366 = vmatpush1.bf16.msra.mxu0 0
    %367 = vmatprep.subr.bf16.mxu0 0
    %368 = vmatpush1.bf16.msra.mxu0 0
    %369 = vmatprep.subr.bf16.mxu0 0
    %370 = vmatpush1.bf16.msra.mxu0 0
    %371 = vmatprep.subr.bf16.mxu0 0
    %372 = vmatpush1.bf16.msra.mxu0 0
    %373 = vmatprep.subr.bf16.mxu0 0
    %374 = vmatpush1.bf16.msra.mxu0 0
    %375 = vmatprep.subr.bf16.mxu0 0
    %376 = vmatpush1.bf16.msra.mxu0 0
    %377 = vmatprep.subr.bf16.mxu0 0
    %378 = vmatpush1.bf16.msra.mxu0 0
    %379 = vmatprep.subr.bf16.mxu0 0
    %380 = vmatpush1.bf16.msra.mxu0 0
    %381 = vmatprep.subr.bf16.mxu0 0
    %382 = vmatpush1.bf16.msra.mxu0 0
    %383 = vmatprep.subr.bf16.mxu0 0
    %384 = vmatpush1.bf16.msra.mxu0 0
    %385 = vmatprep.mubr.bf16.mxu0 0
    %386 = vmatmul.mubr.bf16.gmra.mrb[0].mxu0 %v351
    %v387 = vpop.f32.mrb[0].mxu0
    %v388 = vadd.f32 %v336, %v387
    %v389 = vpop.f32.mrb[0].mxu0
    %v390 = vpop.f32.mrb[0].mxu0
    %v391 = vadd.f32 %v336, %v390
    %v392 = vpop.f32.mrb[0].mxu0
    %393 = vdwg.mxu0
    %v394 = vpack.c.bf16 %v391, %v388
    %v396 = vunpack.c.l.b16 %v394
    %v397 = vunpack.c.h.b16 %v394
    %v398 = vpack.c.b16 %v396, %v396
    %v399 = vpack.c.b16 %v397, %v397
    %402 = vst [vmem:[#allocation11] sm:$0xf] %v398
    %403 = vst [vmem:[#allocation11 + $0x4] sm:$0xf] %v399
    // Predicated region
    $region62: #{tpu_custom_call.1} parent=1 // pred_check
      _
    $region63: #{tpu_custom_call.1} parent=1 // pred_check_branch
      %405 = sbr.rel (0) target = $region65
    $region64: #{tpu_custom_call.1} parent=1 // pred_region
      %s407 = ssub.s32 128, 128
      %408 = vsyncadd [#allocation4], %s407
      %s409 = sshll.u32 [#allocation11], 4
      %s410 = int_to_ptr.vmem [resolvable:$true] %s409
      %415 = dma.vmem_to_hbm [thread:$0]  %s410, 128, %s10, [#allocation4], 64, 64, 4
    $region65: #{tpu_custom_call.1} parent=1 // pred_fallthru
      _
    // Predicated region
    $region66: #{tpu_custom_call.1} parent=1 // pred_check
      _
    $region67: #{tpu_custom_call.1} parent=1 // pred_check_branch
      %417 = sbr.rel (0) target = $region69
    $region68: #{tpu_custom_call.1} parent=1 // pred_region
      %418 = dma.done [#allocation4], 128
    $region69: #{tpu_custom_call.1} parent=1 // pred_fallthru
      _
    %419 = vsyncpa [#allocation3], 1
    %420 = vsyncpa [#allocation6], 1
    %421 = vsyncpa [#allocation9], 1
    %422 = vsyncpa [#allocation4], 1

// kernel: tpu_custom_call.1
$region0: #{tpu_custom_call.1}
  #allocation0 [shape = 'u32[]', space=smem, size = 0x4, offset = 0x4, fixed_abs, tag = 'smem constant byte address 0x4 - core index']
  #allocation1 [shape = 'u32[144,128]{1,0:T(1,128)}', space=vmem, size = 0x12000, scoped, tag = 'internal scratch']
  %s0 = inlined_call_operand.hbm [shape: bf16[16,32], index: 0, kind: input, shape index: {}]
  %s1 = inlined_call_operand.hbm [shape: bf16[32,32], index: 1, kind: input, shape index: {}]
  %s2 = inlined_call_operand.vmem [shape: f32[1,32], index: 2, kind: input, shape index: {}]
  %s3 = inlined_call_operand.hbm [shape: bf16[32,32], index: 3, kind: input, shape index: {}]
  %s4 = inlined_call_operand.vmem [shape: f32[1,32], index: 4, kind: input, shape index: {}]
  %s5 = inlined_call_operand.vmem [shape: bf16[32,32], index: 5, kind: input, shape index: {}]
  %s6 = inlined_call_operand.hbm [shape: f32[1,32], index: 6, kind: input, shape index: {}]
  %s7 = inlined_call_operand.vmem [shape: bf16[16,32], index: 7, kind: input, shape index: {}]
  %s8 = inlined_call_operand.hbm [shape: bf16[32,128], index: 8, kind: input, shape index: {}]
  %s9 = inlined_call_operand.vmem [shape: f32[1,128], index: 9, kind: input, shape index: {}]
  %s10 = inlined_call_operand.hbm [shape: bf16[16,128], index: 10, kind: output, shape index: {}]
  %s11 = sld [smem:[#allocation0]]
  $region70: #{tpu_custom_call.1} parent=0
    _
  %s13 = ssub.s32 1, %s11
  %s14 = scalar_select 0, %s13, %s11
  $region1: #{tpu_custom_call.1} parent=0
    #allocation2 [shape = 'u8[4096]{0}', space=vmem, size = 0x1000, scoped, tag = 'input window, operand 0, single buffered']
    #allocation3 [shape = 's32[1]{0}', space=sflag, size = 0x4, scoped, tag = 'scoped memory for tpu_custom_call.1']
    #allocation4 [shape = 's32[1]{0}', space=sflag, size = 0x4, scoped, tag = 'scoped memory for tpu_custom_call.1']
    #allocation5 [shape = 'u8[8192]{0}', space=vmem, size = 0x2000, scoped, tag = 'input window, operand 1, single buffered']
    #allocation6 [shape = 's32[1]{0}', space=sflag, size = 0x4, scoped, tag = 'scoped memory for tpu_custom_call.1']
    #allocation7 [shape = 'u8[8192]{0}', space=vmem, size = 0x2000, scoped, tag = 'input window, operand 3, single buffered']
    #allocation8 [shape = 'u8[512]{0}', space=vmem, size = 0x400, scoped, tag = 'input window, operand 6, single buffered']
    #allocation9 [shape = 's32[1]{0}', space=sflag, size = 0x4, scoped, tag = 'scoped memory for tpu_custom_call.1']
    #allocation10 [shape = 'u8[8192]{0}', space=vmem, size = 0x2000, scoped, tag = 'input window, operand 8, single buffered']
    #allocation11 [shape = 'u8[4096]{0}', space=vmem, size = 0x1000, scoped, tag = 'output window, operand 0, single buffered']
    %15 = vsyncpa [#allocation3], 0
    %16 = vsyncpa [#allocation6], 0
    %17 = vsyncpa [#allocation9], 0
    %18 = vsyncpa [#allocation4], 0
    // Predicated region
    $region2: #{tpu_custom_call.1} parent=1 // pred_check
      _
    $region3: #{tpu_custom_call.1} parent=1 // pred_check_branch
      %20 = sbr.rel (0) target = $region5
    $region4: #{tpu_custom_call.1} parent=1 // pred_region
      %s22 = ssub.s32 128, 128
      %23 = vsyncadd [#allocation3], %s22
      %s24 = sshll.u32 [#allocation2], 4
      %s25 = int_to_ptr.vmem [resolvable:$true] %s24
      %30 = dma.hbm_to_vmem [thread:$0]  %s0, 128, %s25, [#allocation3], 64, 64, 4
    $region5: #{tpu_custom_call.1} parent=1 // pred_fallthru
      _
    // Predicated region
    $region6: #{tpu_custom_call.1} parent=1 // pred_check
      _
    $region7: #{tpu_custom_call.1} parent=1 // pred_check_branch
      %32 = sbr.rel (0) target = $region9
    $region8: #{tpu_custom_call.1} parent=1 // pred_region
      %s34 = ssub.s32 256, 256
      %35 = vsyncadd [#allocation6], %s34
      %s36 = sshll.u32 [#allocation5], 4
      %s37 = int_to_ptr.vmem [resolvable:$true] %s36
      %42 = dma.hbm_to_vmem [thread:$0]  %s1, 256, %s37, [#allocation6], 64, 64, 4
    $region9: #{tpu_custom_call.1} parent=1 // pred_fallthru
      _
    // Predicated region
    $region10: #{tpu_custom_call.1} parent=1 // pred_check
      _
    $region11: #{tpu_custom_call.1} parent=1 // pred_check_branch
      %44 = sbr.rel (0) target = $region13
    $region12: #{tpu_custom_call.1} parent=1 // pred_region
      _
    $region13: #{tpu_custom_call.1} parent=1 // pred_fallthru
      _
    // Predicated region
    $region14: #{tpu_custom_call.1} parent=1 // pred_check
      _
    $region15: #{tpu_custom_call.1} parent=1 // pred_check_branch
      %46 = sbr.rel (0) target = $region17
    $region16: #{tpu_custom_call.1} parent=1 // pred_region
      %s48 = ssub.s32 256, 256
      %49 = vsyncadd [#allocation6], %s48
      %s50 = sshll.u32 [#allocation7], 4
      %s51 = int_to_ptr.vmem [resolvable:$true] %s50
      %56 = dma.hbm_to_vmem [thread:$0]  %s3, 256, %s51, [#allocation6], 64, 64, 4
    $region17: #{tpu_custom_call.1} parent=1 // pred_fallthru
      _
    // Predicated region
    $region18: #{tpu_custom_call.1} parent=1 // pred_check
      _
    $region19: #{tpu_custom_call.1} parent=1 // pred_check_branch
      %58 = sbr.rel (0) target = $region21
    $region20: #{tpu_custom_call.1} parent=1 // pred_region
      _
    $region21: #{tpu_custom_call.1} parent=1 // pred_fallthru
      _
    // Predicated region
    $region22: #{tpu_custom_call.1} parent=1 // pred_check
      _
    $region23: #{tpu_custom_call.1} parent=1 // pred_check_branch
      %60 = sbr.rel (0) target = $region25
    $region24: #{tpu_custom_call.1} parent=1 // pred_region
      _
    $region25: #{tpu_custom_call.1} parent=1 // pred_fallthru
      _
    // Predicated region
    $region26: #{tpu_custom_call.1} parent=1 // pred_check
      _
    $region27: #{tpu_custom_call.1} parent=1 // pred_check_branch
      %62 = sbr.rel (0) target = $region29
    $region28: #{tpu_custom_call.1} parent=1 // pred_region
      %s64 = ssub.s32 16, 16
      %65 = vsyncadd [#allocation9], %s64
      %s67 = sshll.u32 [#allocation8], 4
      %s68 = int_to_ptr.vmem [resolvable:$true] %s67
      %70 = dma.hbm_to_vmem [thread:$0]  %s6, 16, %s68, [#allocation9]
    $region29: #{tpu_custom_call.1} parent=1 // pred_fallthru
      _
    // Predicated region
    $region30: #{tpu_custom_call.1} parent=1 // pred_check
      _
    $region31: #{tpu_custom_call.1} parent=1 // pred_check_branch
      %72 = sbr.rel (0) target = $region33
    $region32: #{tpu_custom_call.1} parent=1 // pred_region
      _
    $region33: #{tpu_custom_call.1} parent=1 // pred_fallthru
      _
    // Predicated region
    $region34: #{tpu_custom_call.1} parent=1 // pred_check
      _
    $region35: #{tpu_custom_call.1} parent=1 // pred_check_branch
      %74 = sbr.rel (0) target = $region37
    $region36: #{tpu_custom_call.1} parent=1 // pred_region
      %s76 = ssub.s32 256, 256
      %77 = vsyncadd [#allocation9], %s76
      %s78 = sshll.u32 [#allocation10], 4
      %s79 = int_to_ptr.vmem [resolvable:$true] %s78
      %84 = dma.hbm_to_vmem [thread:$0]  %s8, 256, %s79, [#allocation9], 64, 64, 4
    $region37: #{tpu_custom_call.1} parent=1 // pred_fallthru
      _
    // Predicated region
    $region38: #{tpu_custom_call.1} parent=1 // pred_check
      _
    $region39: #{tpu_custom_call.1} parent=1 // pred_check_branch
      %86 = sbr.rel (0) target = $region41
    $region40: #{tpu_custom_call.1} parent=1 // pred_region
      _
    $region41: #{tpu_custom_call.1} parent=1 // pred_fallthru
      _
    // Predicated region
    $region42: #{tpu_custom_call.1} parent=1 // pred_check
      _
    $region43: #{tpu_custom_call.1} parent=1 // pred_check_branch
      %88 = sbr.rel (0) target = $region45
    $region44: #{tpu_custom_call.1} parent=1 // pred_region
      %89 = dma.done [#allocation3], 128
    $region45: #{tpu_custom_call.1} parent=1 // pred_fallthru
      _
    // Predicated region
    $region46: #{tpu_custom_call.1} parent=1 // pred_check
      _
    $region47: #{tpu_custom_call.1} parent=1 // pred_check_branch
      %91 = sbr.rel (0) target = $region49
    $region48: #{tpu_custom_call.1} parent=1 // pred_region
      %92 = dma.done [#allocation6], 256
    $region49: #{tpu_custom_call.1} parent=1 // pred_fallthru
      _
    // Predicated region
    $region50: #{tpu_custom_call.1} parent=1 // pred_check
      _
    $region51: #{tpu_custom_call.1} parent=1 // pred_check_branch
      %94 = sbr.rel (0) target = $region53
    $region52: #{tpu_custom_call.1} parent=1 // pred_region
      %95 = dma.done [#allocation6], 256
    $region53: #{tpu_custom_call.1} parent=1 // pred_fallthru
      _
    // Predicated region
    $region54: #{tpu_custom_call.1} parent=1 // pred_check
      _
    $region55: #{tpu_custom_call.1} parent=1 // pred_check_branch
      %97 = sbr.rel (0) target = $region57
    $region56: #{tpu_custom_call.1} parent=1 // pred_region
      %98 = dma.done [#allocation9], 16
    $region57: #{tpu_custom_call.1} parent=1 // pred_fallthru
      _
    // Predicated region
    $region58: #{tpu_custom_call.1} parent=1 // pred_check
      _
    $region59: #{tpu_custom_call.1} parent=1 // pred_check_branch
      %100 = sbr.rel (0) target = $region61
    $region60: #{tpu_custom_call.1} parent=1 // pred_region
      %101 = dma.done [#allocation9], 256
    $region61: #{tpu_custom_call.1} parent=1 // pred_fallthru
      _
    %v103 = vld [vmem:[#allocation2] sm:$0xf]
    %v104 = vld [vmem:[#allocation2 + $0x4] sm:$0xf]
    %v105 = vld [vmem:[#allocation5] sm:$0xf]
    %v106 = vld [vmem:[#allocation5 + $0x4] sm:$0xf]
    %v107 = vld [vmem:[#allocation5 + $0x8] sm:$0xf]
    %v108 = vld [vmem:[#allocation5 + $0xc] sm:$0xf]
    %v109 = vld [vmem:[%s2] sm:$0x1]
    %v111 = vlaneseq
    %v112 = vshrl.u32 %v111, 7
    %v113 = vsub.s32 0, %v112
    %v114 = vrot.slane %v109, %v113
    %v118 = vunpack.c.l.b16 %v103
    %v119 = vunpack.c.l.b16 %v104
    %v120 = vpack.c.b16 %v119, %v118
    %v125 = vunpack.c.l.b16 %v105
    %v126 = vunpack.c.l.b16 %v106
    %v127 = vunpack.c.l.b16 %v107
    %v128 = vunpack.c.l.b16 %v108
    %v129 = vpack.c.b16 %v126, %v125
    %v130 = vpack.c.b16 %v128, %v127
    %vm133 = vcmask 261120
    %v135 = vsel %vm133, %v120, 0
    %137 = vmatprep.subr.bf16.mxu0 0
    %138 = vmatpush1.bf16.msra.mxu0 %v129
    %139 = vmatprep.subr.bf16.mxu0 0
    %140 = vmatpush1.bf16.msra.mxu0 %v130
    %141 = vmatprep.subr.bf16.mxu0 0
    %142 = vmatpush1.bf16.msra.mxu0 0
    %143 = vmatprep.subr.bf16.mxu0 0
    %144 = vmatpush1.bf16.msra.mxu0 0
    %145 = vmatprep.subr.bf16.mxu0 0
    %146 = vmatpush1.bf16.msra.mxu0 0
    %147 = vmatprep.subr.bf16.mxu0 0
    %148 = vmatpush1.bf16.msra.mxu0 0
    %149 = vmatprep.subr.bf16.mxu0 0
    %150 = vmatpush1.bf16.msra.mxu0 0
    %151 = vmatprep.subr.bf16.mxu0 0
    %152 = vmatpush1.bf16.msra.mxu0 0
    %153 = vmatprep.subr.bf16.mxu0 0
    %154 = vmatpush1.bf16.msra.mxu0 0
    %155 = vmatprep.subr.bf16.mxu0 0
    %156 = vmatpush1.bf16.msra.mxu0 0
    %157 = vmatprep.subr.bf16.mxu0 0
    %158 = vmatpush1.bf16.msra.mxu0 0
    %159 = vmatprep.subr.bf16.mxu0 0
    %160 = vmatpush1.bf16.msra.mxu0 0
    %161 = vmatprep.subr.bf16.mxu0 0
    %162 = vmatpush1.bf16.msra.mxu0 0
    %163 = vmatprep.subr.bf16.mxu0 0
    %164 = vmatpush1.bf16.msra.mxu0 0
    %165 = vmatprep.subr.bf16.mxu0 0
    %166 = vmatpush1.bf16.msra.mxu0 0
    %167 = vmatprep.subr.bf16.mxu0 0
    %168 = vmatpush1.bf16.msra.mxu0 0
    %169 = vmatprep.mubr.bf16.mxu0 0
    %170 = vmatmul.mubr.bf16.gmra.mrb[0].mxu0 %v135
    %v171 = vpop.f32.mrb[0].mxu0
    %v172 = vadd.f32 %v114, %v171
    %v173 = vpop.f32.mrb[0].mxu0
    %v174 = vpop.f32.mrb[0].mxu0
    %v175 = vadd.f32 %v114, %v174
    %v176 = vpop.f32.mrb[0].mxu0
    %177 = vdwg.mxu0
    %v178 = vmax.f32 %v172, 0.0
    %v179 = vmax.f32 %v175, 0.0
    %v180 = vpack.c.bf16 %v179, %v178
    %v181 = vld [vmem:[#allocation7] sm:$0xf]
    %v182 = vld [vmem:[#allocation7 + $0x4] sm:$0xf]
    %v183 = vld [vmem:[#allocation7 + $0x8] sm:$0xf]
    %v184 = vld [vmem:[#allocation7 + $0xc] sm:$0xf]
    %v185 = vld [vmem:[%s4] sm:$0x1]
    %v187 = vlaneseq
    %v188 = vshrl.u32 %v187, 7
    %v189 = vsub.s32 0, %v188
    %v190 = vrot.slane %v185, %v189
    %v196 = vunpack.c.l.b16 %v181
    %v197 = vunpack.c.l.b16 %v182
    %v198 = vunpack.c.l.b16 %v183
    %v199 = vunpack.c.l.b16 %v184
    %v200 = vpack.c.b16 %v197, %v196
    %v201 = vpack.c.b16 %v199, %v198
    %v205 = vsel %vm133, %v180, 0
    %207 = vmatprep.subr.bf16.mxu0 0
    %208 = vmatpush1.bf16.msra.mxu0 %v200
    %209 = vmatprep.subr.bf16.mxu0 0
    %210 = vmatpush1.bf16.msra.mxu0 %v201
    %211 = vmatprep.subr.bf16.mxu0 0
    %212 = vmatpush1.bf16.msra.mxu0 0
    %213 = vmatprep.subr.bf16.mxu0 0
    %214 = vmatpush1.bf16.msra.mxu0 0
    %215 = vmatprep.subr.bf16.mxu0 0
    %216 = vmatpush1.bf16.msra.mxu0 0
    %217 = vmatprep.subr.bf16.mxu0 0
    %218 = vmatpush1.bf16.msra.mxu0 0
    %219 = vmatprep.subr.bf16.mxu0 0
    %220 = vmatpush1.bf16.msra.mxu0 0
    %221 = vmatprep.subr.bf16.mxu0 0
    %222 = vmatpush1.bf16.msra.mxu0 0
    %223 = vmatprep.subr.bf16.mxu0 0
    %224 = vmatpush1.bf16.msra.mxu0 0
    %225 = vmatprep.subr.bf16.mxu0 0
    %226 = vmatpush1.bf16.msra.mxu0 0
    %227 = vmatprep.subr.bf16.mxu0 0
    %228 = vmatpush1.bf16.msra.mxu0 0
    %229 = vmatprep.subr.bf16.mxu0 0
    %230 = vmatpush1.bf16.msra.mxu0 0
    %231 = vmatprep.subr.bf16.mxu0 0
    %232 = vmatpush1.bf16.msra.mxu0 0
    %233 = vmatprep.subr.bf16.mxu0 0
    %234 = vmatpush1.bf16.msra.mxu0 0
    %235 = vmatprep.subr.bf16.mxu0 0
    %236 = vmatpush1.bf16.msra.mxu0 0
    %237 = vmatprep.subr.bf16.mxu0 0
    %238 = vmatpush1.bf16.msra.mxu0 0
    %239 = vmatprep.mubr.bf16.mxu0 0
    %240 = vmatmul.mubr.bf16.gmra.mrb[0].mxu0 %v205
    %v241 = vpop.f32.mrb[0].mxu0
    %v242 = vadd.f32 %v190, %v241
    %v243 = vpop.f32.mrb[0].mxu0
    %v244 = vpop.f32.mrb[0].mxu0
    %v245 = vadd.f32 %v190, %v244
    %v246 = vpop.f32.mrb[0].mxu0
    %247 = vdwg.mxu0
    %v248 = vmax.f32 %v242, 0.0
    %v249 = vmax.f32 %v245, 0.0
    %v250 = vpack.c.bf16 %v249, %v248
    %v251 = vld [vmem:[%s5] sm:$0xf]
    %v252 = vld [vmem:[%s5 + $0x4] sm:$0xf]
    %v253 = vld [vmem:[%s5 + $0x8] sm:$0xf]
    %v254 = vld [vmem:[%s5 + $0xc] sm:$0xf]
    %v255 = vld [vmem:[#allocation8] sm:$0x1]
    %v257 = vlaneseq
    %v258 = vshrl.u32 %v257, 7
    %v259 = vsub.s32 0, %v258
    %v260 = vrot.slane %v255, %v259
    %v266 = vunpack.c.l.b16 %v251
    %v267 = vunpack.c.l.b16 %v252
    %v268 = vunpack.c.l.b16 %v253
    %v269 = vunpack.c.l.b16 %v254
    %v270 = vpack.c.b16 %v267, %v266
    %v271 = vpack.c.b16 %v269, %v268
    %v275 = vsel %vm133, %v250, 0
    %277 = vmatprep.subr.bf16.mxu0 0
    %278 = vmatpush1.bf16.msra.mxu0 %v270
    %279 = vmatprep.subr.bf16.mxu0 0
    %280 = vmatpush1.bf16.msra.mxu0 %v271
    %281 = vmatprep.subr.bf16.mxu0 0
    %282 = vmatpush1.bf16.msra.mxu0 0
    %283 = vmatprep.subr.bf16.mxu0 0
    %284 = vmatpush1.bf16.msra.mxu0 0
    %285 = vmatprep.subr.bf16.mxu0 0
    %286 = vmatpush1.bf16.msra.mxu0 0
    %287 = vmatprep.subr.bf16.mxu0 0
    %288 = vmatpush1.bf16.msra.mxu0 0
    %289 = vmatprep.subr.bf16.mxu0 0
    %290 = vmatpush1.bf16.msra.mxu0 0
    %291 = vmatprep.subr.bf16.mxu0 0
    %292 = vmatpush1.bf16.msra.mxu0 0
    %293 = vmatprep.subr.bf16.mxu0 0
    %294 = vmatpush1.bf16.msra.mxu0 0
    %295 = vmatprep.subr.bf16.mxu0 0
    %296 = vmatpush1.bf16.msra.mxu0 0
    %297 = vmatprep.subr.bf16.mxu0 0
    %298 = vmatpush1.bf16.msra.mxu0 0
    %299 = vmatprep.subr.bf16.mxu0 0
    %300 = vmatpush1.bf16.msra.mxu0 0
    %301 = vmatprep.subr.bf16.mxu0 0
    %302 = vmatpush1.bf16.msra.mxu0 0
    %303 = vmatprep.subr.bf16.mxu0 0
    %304 = vmatpush1.bf16.msra.mxu0 0
    %305 = vmatprep.subr.bf16.mxu0 0
    %306 = vmatpush1.bf16.msra.mxu0 0
    %307 = vmatprep.subr.bf16.mxu0 0
    %308 = vmatpush1.bf16.msra.mxu0 0
    %309 = vmatprep.mubr.bf16.mxu0 0
    %310 = vmatmul.mubr.bf16.gmra.mrb[0].mxu0 %v275
    %v311 = vpop.f32.mrb[0].mxu0
    %v312 = vadd.f32 %v260, %v311
    %v313 = vpop.f32.mrb[0].mxu0
    %v314 = vpop.f32.mrb[0].mxu0
    %v315 = vadd.f32 %v260, %v314
    %v316 = vpop.f32.mrb[0].mxu0
    %317 = vdwg.mxu0
    %v318 = vld [vmem:[%s7] sm:$0xf]
    %v319 = vld [vmem:[%s7 + $0x4] sm:$0xf]
    %v320 = vunpack.c.l.bf16 %v318
    %v321 = vunpack.c.l.bf16 %v319
    %v322 = vadd.f32 %v312, %v320
    %v323 = vadd.f32 %v315, %v321
    %v324 = vmax.f32 %v322, 0.0
    %v325 = vmax.f32 %v323, 0.0
    %v326 = vpack.c.bf16 %v325, %v324
    %v327 = vld [vmem:[#allocation10] sm:$0xf]
    %v328 = vld [vmem:[#allocation10 + $0x4] sm:$0xf]
    %v329 = vld [vmem:[#allocation10 + $0x8] sm:$0xf]
    %v330 = vld [vmem:[#allocation10 + $0xc] sm:$0xf]
    %v331 = vld [vmem:[%s9] sm:$0x1]
    %v333 = vlaneseq
    %v334 = vshrl.u32 %v333, 7
    %v335 = vsub.s32 0, %v334
    %v336 = vrot.slane %v331, %v335
    %v342 = vunpack.c.l.b16 %v327
    %v343 = vunpack.c.l.b16 %v328
    %v344 = vunpack.c.l.b16 %v329
    %v345 = vunpack.c.l.b16 %v330
    %v346 = vpack.c.b16 %v343, %v342
    %v347 = vpack.c.b16 %v345, %v344
    %v351 = vsel %vm133, %v326, 0
    %353 = vmatprep.subr.bf16.mxu0 0
    %354 = vmatpush1.bf16.msra.mxu0 %v346
    %355 = vmatprep.subr.bf16.mxu0 0
    %356 = vmatpush1.bf16.msra.mxu0 %v347
    %357 = vmatprep.subr.bf16.mxu0 0
    %358 = vmatpush1.bf16.msra.mxu0 0
    %359 = vmatprep.subr.bf16.mxu0 0
    %360 = vmatpush1.bf16.msra.mxu0 0
    %361 = vmatprep.subr.bf16.mxu0 0
    %362 = vmatpush1.bf16.msra.mxu0 0
    %363 = vmatprep.subr.bf16.mxu0 0
    %364 = vmatpush1.bf16.msra.mxu0 0
    %365 = vmatprep.subr.bf16.mxu0 0
    %366 = vmatpush1.bf16.msra.mxu0 0
    %367 = vmatprep.subr.bf16.mxu0 0
    %368 = vmatpush1.bf16.msra.mxu0 0
    %369 = vmatprep.subr.bf16.mxu0 0
    %370 = vmatpush1.bf16.msra.mxu0 0
    %371 = vmatprep.subr.bf16.mxu0 0
    %372 = vmatpush1.bf16.msra.mxu0 0
    %373 = vmatprep.subr.bf16.mxu0 0
    %374 = vmatpush1.bf16.msra.mxu0 0
    %375 = vmatprep.subr.bf16.mxu0 0
    %376 = vmatpush1.bf16.msra.mxu0 0
    %377 = vmatprep.subr.bf16.mxu0 0
    %378 = vmatpush1.bf16.msra.mxu0 0
    %379 = vmatprep.subr.bf16.mxu0 0
    %380 = vmatpush1.bf16.msra.mxu0 0
    %381 = vmatprep.subr.bf16.mxu0 0
    %382 = vmatpush1.bf16.msra.mxu0 0
    %383 = vmatprep.subr.bf16.mxu0 0
    %384 = vmatpush1.bf16.msra.mxu0 0
    %385 = vmatprep.mubr.bf16.mxu0 0
    %386 = vmatmul.mubr.bf16.gmra.mrb[0].mxu0 %v351
    %v387 = vpop.f32.mrb[0].mxu0
    %v388 = vadd.f32 %v336, %v387
    %v389 = vpop.f32.mrb[0].mxu0
    %v390 = vpop.f32.mrb[0].mxu0
    %v391 = vadd.f32 %v336, %v390
    %v392 = vpop.f32.mrb[0].mxu0
    %393 = vdwg.mxu0
    %v394 = vpack.c.bf16 %v391, %v388
    %v396 = vunpack.c.l.b16 %v394
    %v397 = vunpack.c.h.b16 %v394
    %v398 = vpack.c.b16 %v396, %v396
    %v399 = vpack.c.b16 %v397, %v397
    %402 = vst [vmem:[#allocation11] sm:$0xf] %v398
    %403 = vst [vmem:[#allocation11 + $0x4] sm:$0xf] %v399
    // Predicated region
    $region62: #{tpu_custom_call.1} parent=1 // pred_check
      _
    $region63: #{tpu_custom_call.1} parent=1 // pred_check_branch
      %405 = sbr.rel (0) target = $region65
    $region64: #{tpu_custom_call.1} parent=1 // pred_region
      %s407 = ssub.s32 128, 128
      %408 = vsyncadd [#allocation4], %s407
      %s409 = sshll.u32 [#allocation11], 4
      %s410 = int_to_ptr.vmem [resolvable:$true] %s409
      %415 = dma.vmem_to_hbm [thread:$0]  %s410, 128, %s10, [#allocation4], 64, 64, 4
    $region65: #{tpu_custom_call.1} parent=1 // pred_fallthru
      _
    // Predicated region
    $region66: #{tpu_custom_call.1} parent=1 // pred_check
      _
    $region67: #{tpu_custom_call.1} parent=1 // pred_check_branch
      %417 = sbr.rel (0) target = $region69
    $region68: #{tpu_custom_call.1} parent=1 // pred_region
      %418 = dma.done [#allocation4], 128
    $region69: #{tpu_custom_call.1} parent=1 // pred_fallthru
      _
    %419 = vsyncpa [#allocation3], 1
    %420 = vsyncpa [#allocation6], 1
    %421 = vsyncpa [#allocation9], 1
    %422 = vsyncpa [#allocation4], 1

</llo_original>
